<compile_context>
chip_gen: v7x
topology: tpu7x:2x2x1
jax: 0.10.0
libtpu: 0.0.40
codegen_flags: <defaults>
</compile_context>

<pallas_src>
import functools

import jax
import jax.numpy as jnp
from jax import lax
from jax.experimental import pallas as pl
from jax.experimental.pallas import tpu as pltpu


def _make_pow(power: float):
    """Elementwise x**p. Small integer p stays on the 4 VALUs (repeated
    multiplies) instead of the single EUP unit (exp/log)."""
    if float(power) == 2.0:
        return lambda v: v * v
    if float(power).is_integer() and 1.0 <= power <= 8.0:
        p_int = int(power)

        def _ipow(v):
            acc = v
            for _ in range(p_int - 1):
                acc = acc * v
            return acc

        return _ipow
    return lambda v: jnp.power(v, power)


def _normalize_kernel(x_ref, o_ref, *, power: float, channels: int):
    # x_ref / o_ref: (C, TH, W) tile in VMEM.  W is on the lane axis, TH on
    # sublanes, channels on a leading axis (full-vreg slices per channel).
    ppow = _make_pow(power)

    if channels <= 32:
        # Per-channel accumulation in f32: never materializes a full f32 copy
        # of the block (important for bf16 inputs on v5e's tight VMEM budget).
        s = ppow(x_ref[0].astype(jnp.float32))
        for c in range(1, channels):
            s = s + ppow(x_ref[c].astype(jnp.float32))
    else:
        xf = x_ref[...].astype(jnp.float32)
        s = jnp.sum(ppow(xf), axis=0)

    # Per-position inverse norm, computed once.
    if float(power) == 2.0:
        inv = lax.rsqrt(s)                      # EUP rsqrt (free slot while DMA-bound)
    else:
        inv = jnp.power(s, -1.0 / power)
    # TODO(synk): matches the module exactly (no eps clamp, no abs for odd p);
    # zero-norm positions produce inf/NaN just like the PyTorch reference.

    # Multiply in f32, cast once to the output dtype (same numerics everywhere).
    if channels <= 32:
        for c in range(channels):
            o_ref[c] = (x_ref[c].astype(jnp.float32) * inv).astype(o_ref.dtype)
    else:
        o_ref[...] = (x_ref[...].astype(jnp.float32) * inv).astype(o_ref.dtype)


def _target_block_bytes() -> int:
    """Per-generation input-block budget (double-buffered in + out blocks plus
    small f32 temporaries must fit the scoped-VMEM default)."""
    try:
        kind = jax.devices()[0].device_kind.lower()
    except Exception:
        kind = ""
    if "v5" in kind:            # v5e: 16 MiB scoped default — stay lean
        return 1 * 1024 * 1024
    if "v6" in kind or "v7" in kind:   # 32 MiB scoped default — amortize per-step overhead
        return 4 * 1024 * 1024
    return 2 * 1024 * 1024      # unknown: conservative


def normalize(x: jax.Array, power: float = 2.0) -> jax.Array:
    """L_p-normalize over the channel dim (dim 1) of an NCHW tensor, matching
    the PyTorch `Normalize.forward` exactly."""
    N, C, H, W = x.shape
    itemsize = x.dtype.itemsize

    # Choose TH (rows of H per block): multiple of 8, or the full extent H.
    row_bytes = C * W * itemsize
    target = _target_block_bytes()
    if H * row_bytes <= target:
        th = H
    else:
        th = (target // row_bytes) // 8 * 8
        th = max(8, th)
        th = min(th, H)  # if clamped, th == H (full extent is always legal)

    # v7x has 2 TensorCores: when N == 1, make sure the H axis has >= 2 blocks
    # so both cores (and both halves of the chip's bandwidth) are used.
    if N == 1 and pl.cdiv(H, th) < 2:
        half = -(-H // 2)
        th_split = ((half + 7) // 8) * 8
        if 0 < th_split < H:
            th = th_split

    grid = (N, pl.cdiv(H, th))

    kernel = functools.partial(_normalize_kernel, power=float(power), channels=C)

    return pl.pallas_call(
        kernel,
        out_shape=jax.ShapeDtypeStruct((N, C, H, W), x.dtype),
        grid_spec=pltpu.PrefetchScalarGridSpec(
            num_scalar_prefetch=0,
            grid=grid,
            in_specs=[pl.BlockSpec((None, C, th, W), lambda n, i: (n, 0, i, 0))],
            out_specs=pl.BlockSpec((None, C, th, W), lambda n, i: (n, 0, i, 0)),
        ),
        compiler_params=pltpu.CompilerParams(
            # Every (n, h-block) tile is independent; 'parallel' lets v7x shard
            # the grid across its two TensorCores (no-op on v5e/v6e).
            dimension_semantics=("parallel", "parallel"),
        ),
    )(x)


if __name__ == "__main__":
    key = jax.random.PRNGKey(0)
    N, C, H, W = 2, 4, 16, 16
    x = jax.random.normal(key, (N, C, H, W), dtype=jnp.float32)

    out = jax.block_until_ready(normalize(x, power=2.0))

    # Plain-JAX reference mirroring the PyTorch forward exactly.
    norm = jnp.power(jnp.sum(jnp.power(x, 2.0), axis=1, keepdims=True), 0.5)
    ref = x / norm
    assert out.shape == x.shape and out.dtype == x.dtype
    assert jnp.allclose(out, ref, atol=1e-5, rtol=1e-5), "mismatch vs reference"

    print("KERNEL_OK")
</pallas_src>

<mosaic_0001>
module attributes {stable_mosaic.version = 11 : i64} {
  func.func @_normalize_kernel(%arg0: i32, %arg1: i32, %arg2: memref<1x4x16x16xf32, #tpu.memory_space<vmem>>, %arg3: memref<1x4x16x16xf32, #tpu.memory_space<vmem>>) attributes {dimension_semantics = [#tpu.dimension_semantics<parallel>, #tpu.dimension_semantics<parallel>], iteration_bounds = array<i64: 2, 1>, scalar_prefetch = 0 : i64, scratch_operands = 0 : i64, tpu.core_type = #tpu.core_type<tc>, window_params = [{transform_indices = @transform_0, window_bounds = array<i64: 1, 4, 16, 16>}, {transform_indices = @transform_1, window_bounds = array<i64: 1, 4, 16, 16>}]} {
    %c0 = arith.constant 0 : index
    %c0_0 = arith.constant 0 : index
    %c0_1 = arith.constant 0 : index
    %c0_2 = arith.constant 0 : index
    %0 = vector.load %arg2[%c0, %c0_0, %c0_1, %c0_2] : memref<1x4x16x16xf32, #tpu.memory_space<vmem>>, vector<1x1x16x16xf32>
    %1 = vector.shape_cast %0 : vector<1x1x16x16xf32> to vector<16x16xf32>
    %2 = arith.mulf %1, %1 : vector<16x16xf32>
    %c0_3 = arith.constant 0 : index
    %c1 = arith.constant 1 : index
    %c0_4 = arith.constant 0 : index
    %c0_5 = arith.constant 0 : index
    %3 = vector.load %arg2[%c0_3, %c1, %c0_4, %c0_5] : memref<1x4x16x16xf32, #tpu.memory_space<vmem>>, vector<1x1x16x16xf32>
    %4 = vector.shape_cast %3 : vector<1x1x16x16xf32> to vector<16x16xf32>
    %5 = arith.mulf %4, %4 : vector<16x16xf32>
    %6 = arith.addf %2, %5 : vector<16x16xf32>
    %c0_6 = arith.constant 0 : index
    %c2 = arith.constant 2 : index
    %c0_7 = arith.constant 0 : index
    %c0_8 = arith.constant 0 : index
    %7 = vector.load %arg2[%c0_6, %c2, %c0_7, %c0_8] : memref<1x4x16x16xf32, #tpu.memory_space<vmem>>, vector<1x1x16x16xf32>
    %8 = vector.shape_cast %7 : vector<1x1x16x16xf32> to vector<16x16xf32>
    %9 = arith.mulf %8, %8 : vector<16x16xf32>
    %10 = arith.addf %6, %9 : vector<16x16xf32>
    %c0_9 = arith.constant 0 : index
    %c3 = arith.constant 3 : index
    %c0_10 = arith.constant 0 : index
    %c0_11 = arith.constant 0 : index
    %11 = vector.load %arg2[%c0_9, %c3, %c0_10, %c0_11] : memref<1x4x16x16xf32, #tpu.memory_space<vmem>>, vector<1x1x16x16xf32>
    %12 = vector.shape_cast %11 : vector<1x1x16x16xf32> to vector<16x16xf32>
    %13 = arith.mulf %12, %12 : vector<16x16xf32>
    %14 = arith.addf %10, %13 : vector<16x16xf32>
    %15 = math.rsqrt %14 : vector<16x16xf32>
    %c0_12 = arith.constant 0 : index
    %c0_13 = arith.constant 0 : index
    %c0_14 = arith.constant 0 : index
    %c0_15 = arith.constant 0 : index
    %16 = vector.load %arg2[%c0_12, %c0_13, %c0_14, %c0_15] : memref<1x4x16x16xf32, #tpu.memory_space<vmem>>, vector<1x1x16x16xf32>
    %17 = vector.shape_cast %16 : vector<1x1x16x16xf32> to vector<16x16xf32>
    %18 = arith.mulf %17, %15 : vector<16x16xf32>
    %c0_16 = arith.constant 0 : index
    %c0_17 = arith.constant 0 : index
    %c0_18 = arith.constant 0 : index
    %c0_19 = arith.constant 0 : index
    %19 = vector.load %arg3[%c0_16, %c0_17, %c0_18, %c0_19] : memref<1x4x16x16xf32, #tpu.memory_space<vmem>>, vector<1x1x16x16xf32>
    %20 = vector.shape_cast %19 : vector<1x1x16x16xf32> to vector<16x16xf32>
    %21 = vector.shape_cast %18 : vector<16x16xf32> to vector<1x1x16x16xf32>
    tpu.vector_store %arg3[%c0_16, %c0_17, %c0_18, %c0_19], %21 {strides = array<i32>} : memref<1x4x16x16xf32, #tpu.memory_space<vmem>>, vector<1x1x16x16xf32>,
    %c0_20 = arith.constant 0 : index
    %c1_21 = arith.constant 1 : index
    %c0_22 = arith.constant 0 : index
    %c0_23 = arith.constant 0 : index
    %22 = vector.load %arg2[%c0_20, %c1_21, %c0_22, %c0_23] : memref<1x4x16x16xf32, #tpu.memory_space<vmem>>, vector<1x1x16x16xf32>
    %23 = vector.shape_cast %22 : vector<1x1x16x16xf32> to vector<16x16xf32>
    %24 = arith.mulf %23, %15 : vector<16x16xf32>
    %c0_24 = arith.constant 0 : index
    %c1_25 = arith.constant 1 : index
    %c0_26 = arith.constant 0 : index
    %c0_27 = arith.constant 0 : index
    %25 = vector.load %arg3[%c0_24, %c1_25, %c0_26, %c0_27] : memref<1x4x16x16xf32, #tpu.memory_space<vmem>>, vector<1x1x16x16xf32>
    %26 = vector.shape_cast %25 : vector<1x1x16x16xf32> to vector<16x16xf32>
    %27 = vector.shape_cast %24 : vector<16x16xf32> to vector<1x1x16x16xf32>
    tpu.vector_store %arg3[%c0_24, %c1_25, %c0_26, %c0_27], %27 {strides = array<i32>} : memref<1x4x16x16xf32, #tpu.memory_space<vmem>>, vector<1x1x16x16xf32>,
    %c0_28 = arith.constant 0 : index
    %c2_29 = arith.constant 2 : index
    %c0_30 = arith.constant 0 : index
    %c0_31 = arith.constant 0 : index
    %28 = vector.load %arg2[%c0_28, %c2_29, %c0_30, %c0_31] : memref<1x4x16x16xf32, #tpu.memory_space<vmem>>, vector<1x1x16x16xf32>
    %29 = vector.shape_cast %28 : vector<1x1x16x16xf32> to vector<16x16xf32>
    %30 = arith.mulf %29, %15 : vector<16x16xf32>
    %c0_32 = arith.constant 0 : index
    %c2_33 = arith.constant 2 : index
    %c0_34 = arith.constant 0 : index
    %c0_35 = arith.constant 0 : index
    %31 = vector.load %arg3[%c0_32, %c2_33, %c0_34, %c0_35] : memref<1x4x16x16xf32, #tpu.memory_space<vmem>>, vector<1x1x16x16xf32>
    %32 = vector.shape_cast %31 : vector<1x1x16x16xf32> to vector<16x16xf32>
    %33 = vector.shape_cast %30 : vector<16x16xf32> to vector<1x1x16x16xf32>
    tpu.vector_store %arg3[%c0_32, %c2_33, %c0_34, %c0_35], %33 {strides = array<i32>} : memref<1x4x16x16xf32, #tpu.memory_space<vmem>>, vector<1x1x16x16xf32>,
    %c0_36 = arith.constant 0 : index
    %c3_37 = arith.constant 3 : index
    %c0_38 = arith.constant 0 : index
    %c0_39 = arith.constant 0 : index
    %34 = vector.load %arg2[%c0_36, %c3_37, %c0_38, %c0_39] : memref<1x4x16x16xf32, #tpu.memory_space<vmem>>, vector<1x1x16x16xf32>
    %35 = vector.shape_cast %34 : vector<1x1x16x16xf32> to vector<16x16xf32>
    %36 = arith.mulf %35, %15 : vector<16x16xf32>
    %c0_40 = arith.constant 0 : index
    %c3_41 = arith.constant 3 : index
    %c0_42 = arith.constant 0 : index
    %c0_43 = arith.constant 0 : index
    %37 = vector.load %arg3[%c0_40, %c3_41, %c0_42, %c0_43] : memref<1x4x16x16xf32, #tpu.memory_space<vmem>>, vector<1x1x16x16xf32>
    %38 = vector.shape_cast %37 : vector<1x1x16x16xf32> to vector<16x16xf32>
    %39 = vector.shape_cast %36 : vector<16x16xf32> to vector<1x1x16x16xf32>
    tpu.vector_store %arg3[%c0_40, %c3_41, %c0_42, %c0_43], %39 {strides = array<i32>} : memref<1x4x16x16xf32, #tpu.memory_space<vmem>>, vector<1x1x16x16xf32>,
    return
  }
  func.func @transform_0(%arg0: i32, %arg1: i32) -> (i32, i32, i32, i32) {
    %c0_i32 = arith.constant 0 : i32
    %c0_i32_0 = arith.constant 0 : i32
    %c0_i32_1 = arith.constant 0 : i32
    return %arg0, %c0_i32, %arg1, %c0_i32_0 : i32, i32, i32, i32
  }
  func.func @transform_1(%arg0: i32, %arg1: i32) -> (i32, i32, i32, i32) {
    %c0_i32 = arith.constant 0 : i32
    %c0_i32_0 = arith.constant 0 : i32
    %c0_i32_1 = arith.constant 0 : i32
    return %arg0, %c0_i32, %arg1, %c0_i32_0 : i32, i32, i32, i32
  }
}

</mosaic_0001>

<llo_original>
// kernel: tpu_custom_call.1
$region0: #{tpu_custom_call.1}
  #allocation0 [shape = 'u32[]', space=smem, size = 0x4, offset = 0x4, fixed_abs, tag = 'smem constant byte address 0x4 - core index']
  #allocation1 [shape = 'u32[144,128]{1,0:T(1,128)}', space=vmem, size = 0x12000, scoped, tag = 'internal scratch']
  %s0 = inlined_call_operand.hbm [shape: f32[2,4,16,16], index: 0, kind: input, shape index: {}]
  %s1 = inlined_call_operand.hbm [shape: f32[2,4,16,16], index: 1, kind: output, shape index: {}]
  %s2 = sld [smem:[#allocation0]]
  $region41: #{tpu_custom_call.1} parent=0
    _
  %s4 = ssub.s32 1, %s2
  %s5 = scalar_select 0, %s4, %s2
  $region1: #{tpu_custom_call.1} parent=0
    #allocation2 [shape = 'u8[65536]{0}', space=vmem, size = 0x10000, scoped, tag = 'input window, operand 0']
    #allocation3 [shape = 's32[2]{0}', space=sflag, size = 0x8, scoped, tag = 'scoped memory for tpu_custom_call.1']
    #allocation4 [shape = 's32[2]{0}', space=sflag, size = 0x8, scoped, tag = 'scoped memory for tpu_custom_call.1']
    #allocation5 [shape = 'u8[65536]{0}', space=vmem, size = 0x10000, scoped, tag = 'output window, operand 0']
    %6 = vsyncpa [#allocation3], 0
    %s7 = scalar_lea.sflag [#allocation3], 1
    %8 = vsyncpa %s7, 0
    %9 = vsyncpa [#allocation4], 0
    %s10 = scalar_lea.sflag [#allocation4], 1
    %11 = vsyncpa %s10, 0
    loop: start=0, step=1, limit=4
    $region2: #{tpu_custom_call.1} parent=1 // loop_pre_header
      _
    $region3: #{tpu_custom_call.1} parent=1 // loop_header
      %s13 = sphi 0, %s17
      %p14 = scmp.ge.s32.totalorder %s13, 4
      %s20 = sphi 0, %s32
      %s21 = sphi 0, %s28
      %s22 = sphi 0, %s20
      %s23 = sphi 0, %s21
      %s24 = sphi 0, %s22
      %s25 = sphi 0, %s23
      %s37 = sphi 0, %s39
      %s40 = sphi 0, %s37
      %s41 = sphi 0, %s40
      %s57 = sphi 0, %s41
      %s65 = sphi 0, %s67
      %s68 = sphi 0, %s65
      %s69 = sphi 0, %s68
      %s85 = sphi 0, %s69
    $region4: #{tpu_custom_call.1} parent=1 // loop_header_branch
      %16 = sbr.rel (%p14) target = $region8
    $region5: #{tpu_custom_call.1} parent=1 // loop_body
      %s18 = ssub.s32 %s13, 1
      %s19 = ssub.s32 %s13, 2
      %s26 = sadd.s32 1, %s21
      %p27 = scmp.ge.s32.totalorder %s26, 1
      %s28 = scalar_select %p27, 0, %s26
      %s29 = sadd.s32 1, %s20
      %s30 = scalar_select %p27, %s29, %s20
      %p31 = scmp.ge.s32.totalorder %s30, 2
      %s32 = scalar_select %p31, 0, %s30
      %s33 = ssub.s32 %s20, %s32
      %s34 = ssub.s32 %s21, %s28
      %s35 = sor.u32 %s33, %s34
      %p36 = scmp.eq.s32.totalorder %s35, 0
      %s38 = sadd.s32 %s37, 1
      %s39 = scalar_select %p36, %s37, %s38
      %p42 = pneg %p36
      %p43 = scmp.eq.s32.totalorder %s13, 1
      %p44 = por %p42, %p43
      %p45 = scmp.ne.s32.totalorder %s37, %s40
      %p46 = scmp.eq.s32.totalorder %s13, 0
      %p47 = por %p45, %p46
      %p48 = scmp.ne.s32.totalorder %s37, %s40
      %p49 = scmp.eq.s32.totalorder %s18, 1
      %p50 = por %p48, %p49
      %p51 = scmp.ne.s32.totalorder %s40, %s41
      %p52 = scmp.eq.s32.totalorder %s18, 0
      %p53 = por %p51, %p52
      %p54 = scmp.ne.s32.totalorder %s40, %s41
      %p55 = scmp.eq.s32.totalorder %s19, 1
      %p56 = por %p54, %p55
      %p58 = scmp.ne.s32.totalorder %s41, %s57
      %p59 = scmp.eq.s32.totalorder %s19, 0
      %p60 = por %p58, %p59
      %s61 = ssub.s32 %s20, %s32
      %s62 = ssub.s32 %s21, %s28
      %s63 = sor.u32 %s61, %s62
      %p64 = scmp.eq.s32.totalorder %s63, 0
      %s66 = sadd.s32 %s65, 1
      %s67 = scalar_select %p64, %s65, %s66
      %p70 = pneg %p64
      %p71 = scmp.eq.s32.totalorder %s13, 1
      %p72 = por %p70, %p71
      %p73 = scmp.ne.s32.totalorder %s65, %s68
      %p74 = scmp.eq.s32.totalorder %s13, 0
      %p75 = por %p73, %p74
      %p76 = scmp.ne.s32.totalorder %s65, %s68
      %p77 = scmp.eq.s32.totalorder %s18, 1
      %p78 = por %p76, %p77
      %p79 = scmp.ne.s32.totalorder %s68, %s69
      %p80 = scmp.eq.s32.totalorder %s18, 0
      %p81 = por %p79, %p80
      %p82 = scmp.ne.s32.totalorder %s68, %s69
      %p83 = scmp.eq.s32.totalorder %s19, 1
      %p84 = por %p82, %p83
      %p86 = scmp.ne.s32.totalorder %s69, %s85
      %p87 = scmp.eq.s32.totalorder %s19, 0
      %p88 = por %p86, %p87
      %p89 = scmp.le.s32.totalorder 1, %s13
      %p90 = scmp.lt.s32.totalorder %s13, 3
      %p91 = pnand %p89, %p90
      %p92 = pneg %p91
      // Predicated region
      $region9: #{tpu_custom_call.1} parent=5 // pred_check
        _
      $region10: #{tpu_custom_call.1} parent=5 // pred_check_branch
        %94 = sbr.rel (%p91) target = $region12
      $region11: #{tpu_custom_call.1} parent=5 // pred_region
        %s95 = ssub.s32 %s13, 1
      $region12: #{tpu_custom_call.1} parent=5 // pred_fallthru
        _
      %p96 = scmp.lt.s32.totalorder %s13, 2
      // Predicated region
      $region13: #{tpu_custom_call.1} parent=5 // pred_check
        %p97 = pneg %p96
      $region14: #{tpu_custom_call.1} parent=5 // pred_check_branch
        %99 = sbr.rel (%p97) target = $region16
      $region15: #{tpu_custom_call.1} parent=5 // pred_region
        // Predicated region
        $region17: #{tpu_custom_call.1} parent=15 // pred_check
          %p100 = pneg %p47
        $region18: #{tpu_custom_call.1} parent=15 // pred_check_branch
          %102 = sbr.rel (%p100) target = $region20
        $region19: #{tpu_custom_call.1} parent=15 // pred_region
          %s103 = sand.u32 %s37, 1
          %s104 = scalar_lea.sflag [#allocation3], %s103
          %s105 = sand.u32 %s37, 1
          %s106 = smul.addr %s105, 64
          %s107 = scalar_lea.vmem [#allocation2], %s106
          %s108 = smul.u32 2, %s21
          %s110 = ssub.s32 1024, 1024
          %111 = vsyncadd %s104, %s110
          %s112 = smul.addr %s20, 8
          %s113 = sadd.s32 %s108, %s112
          %s114 = smul.addr %s113, 128
          %s115 = scalar_lea.hbm %s0, %s114
          %s116 = sshll.u32 %s107, 4
          %s117 = int_to_ptr.vmem [resolvable:$true] %s116
          %122 = dma.hbm_to_vmem [thread:$0]  %s115, 1024, %s117, %s104, 128, 128, 8
        $region20: #{tpu_custom_call.1} parent=15 // pred_fallthru
          _
      $region16: #{tpu_custom_call.1} parent=5 // pred_fallthru
        _
      %p123 = scmp.le.s32.totalorder 1, %s13
      %p124 = scmp.lt.s32.totalorder %s13, 3
      %p125 = pnand %p123, %p124
      %p126 = pneg %p125
      // Predicated region
      $region21: #{tpu_custom_call.1} parent=5 // pred_check
        _
      $region22: #{tpu_custom_call.1} parent=5 // pred_check_branch
        %128 = sbr.rel (%p125) target = $region24
      $region23: #{tpu_custom_call.1} parent=5 // pred_region
        %s129 = ssub.s32 %s13, 1
        %s130 = sand.u32 %s40, 1
        %s131 = scalar_lea.sflag [#allocation3], %s130
        %s132 = sand.u32 %s40, 1
        %s133 = smul.addr %s132, 64
        %s134 = scalar_lea.vmem [#allocation2], %s133
        // Predicated region
        $region25: #{tpu_custom_call.1} parent=23 // pred_check
          %p135 = pneg %p53
        $region26: #{tpu_custom_call.1} parent=23 // pred_check_branch
          %137 = sbr.rel (%p135) target = $region28
        $region27: #{tpu_custom_call.1} parent=23 // pred_region
          %138 = dma.done %s131, 1024
        $region28: #{tpu_custom_call.1} parent=23 // pred_fallthru
          _
        %s139 = sand.u32 %s40, 1
        %s140 = scalar_lea.sflag [#allocation3], %s139
        %s141 = sand.u32 %s40, 1
        %s142 = smul.addr %s141, 64
        %s143 = scalar_lea.vmem [#allocation2], %s142
        %p144 = pneg %p53
        %p145 = pneg %p50
        %p146 = pneg %p81
        %p147 = pneg %p78
        %s148 = sand.u32 %s68, 1
        %s149 = scalar_lea.sflag [#allocation4], %s148
        %s150 = sand.u32 %s68, 1
        %s151 = smul.addr %s150, 64
        %s152 = scalar_lea.vmem [#allocation5], %s151
        %s153 = smul.u32 2, %s23
        %s154 = smul.u32 2, %s23
        %v155 = vld [vmem:[%s134] sm:$0xff]
        %v156 = vld [vmem:[%s134 + $0x8] sm:$0xff]
        %v157 = vmul.f32 %v155, %v155
        %v158 = vmul.f32 %v156, %v156
        %s159 = scalar_lea.vmem %s134, 16 [#allocation2]
        %v160 = vld [vmem:[%s159] sm:$0xff]
        %v161 = vld [vmem:[%s159 + $0x8] sm:$0xff]
        %v162 = vmul.f32 %v160, %v160
        %v163 = vmul.f32 %v161, %v161
        %v164 = vadd.f32 %v157, %v162
        %v165 = vadd.f32 %v158, %v163
        %s166 = scalar_lea.vmem %s134, 32 [#allocation2]
        %v167 = vld [vmem:[%s166] sm:$0xff]
        %v168 = vld [vmem:[%s166 + $0x8] sm:$0xff]
        %v169 = vmul.f32 %v167, %v167
        %v170 = vmul.f32 %v168, %v168
        %v171 = vadd.f32 %v164, %v169
        %v172 = vadd.f32 %v165, %v170
        %s173 = scalar_lea.vmem %s134, 48 [#allocation2]
        %v174 = vld [vmem:[%s173] sm:$0xff]
        %v175 = vld [vmem:[%s173 + $0x8] sm:$0xff]
        %v176 = vmul.f32 %v174, %v174
        %v177 = vmul.f32 %v175, %v175
        %v178 = vadd.f32 %v171, %v176
        %v179 = vadd.f32 %v172, %v177
        %v180 = vrsqrt.pop %v178
        %v181 = vrsqrt.pop %v179
        %v182 = vmul.f32 %v155, %v180
        %v183 = vmul.f32 %v156, %v181
        %vm184 = vcmask 130048
        %185 = vst.msk [vmem:[%s152] sm:$0xff] %vm184, %v182
        %186 = vst.msk [vmem:[%s152 + $0x8] sm:$0xff] %vm184, %v183
        %v187 = vld [vmem:[%s159] sm:$0xff]
        %v188 = vld [vmem:[%s159 + $0x8] sm:$0xff]
        %v189 = vmul.f32 %v187, %v180
        %v190 = vmul.f32 %v188, %v181
        %s191 = scalar_lea.vmem %s152, 16 [#allocation5]
        %192 = vst.msk [vmem:[%s191] sm:$0xff] %vm184, %v189
        %193 = vst.msk [vmem:[%s191 + $0x8] sm:$0xff] %vm184, %v190
        %v194 = vld [vmem:[%s166] sm:$0xff]
        %v195 = vld [vmem:[%s166 + $0x8] sm:$0xff]
        %v196 = vmul.f32 %v194, %v180
        %v197 = vmul.f32 %v195, %v181
        %s198 = scalar_lea.vmem %s152, 32 [#allocation5]
        %199 = vst.msk [vmem:[%s198] sm:$0xff] %vm184, %v196
        %200 = vst.msk [vmem:[%s198 + $0x8] sm:$0xff] %vm184, %v197
        %v201 = vld [vmem:[%s173] sm:$0xff]
        %v202 = vld [vmem:[%s173 + $0x8] sm:$0xff]
        %v203 = vmul.f32 %v201, %v180
        %v204 = vmul.f32 %v202, %v181
        %s205 = scalar_lea.vmem %s152, 48 [#allocation5]
        %206 = vst.msk [vmem:[%s205] sm:$0xff] %vm184, %v203
        %207 = vst.msk [vmem:[%s205 + $0x8] sm:$0xff] %vm184, %v204
        %s208 = sand.u32 %s68, 1
        %s209 = scalar_lea.sflag [#allocation4], %s208
        %s210 = sand.u32 %s68, 1
        %s211 = smul.addr %s210, 64
        %s212 = scalar_lea.vmem [#allocation5], %s211
        // Predicated region
        $region29: #{tpu_custom_call.1} parent=23 // pred_check
          %p213 = pneg %p78
        $region30: #{tpu_custom_call.1} parent=23 // pred_check_branch
          %215 = sbr.rel (%p213) target = $region32
        $region31: #{tpu_custom_call.1} parent=23 // pred_region
          %s216 = smul.u32 2, %s23
          %s218 = ssub.s32 1024, 1024
          %219 = vsyncadd %s209, %s218
          %s220 = smul.addr %s22, 8
          %s221 = sadd.s32 %s216, %s220
          %s222 = smul.addr %s221, 128
          %s223 = scalar_lea.hbm %s1, %s222
          %s224 = sshll.u32 %s212, 4
          %s225 = int_to_ptr.vmem [resolvable:$true] %s224
          %230 = dma.vmem_to_hbm [thread:$0]  %s225, 1024, %s223, %s209, 128, 128, 8
        $region32: #{tpu_custom_call.1} parent=23 // pred_fallthru
          _
      $region24: #{tpu_custom_call.1} parent=5 // pred_fallthru
        _
      %p231 = scmp.le.s32.totalorder 2, %s13
      // Predicated region
      $region33: #{tpu_custom_call.1} parent=5 // pred_check
        %p232 = pneg %p231
      $region34: #{tpu_custom_call.1} parent=5 // pred_check_branch
        %234 = sbr.rel (%p232) target = $region36
      $region35: #{tpu_custom_call.1} parent=5 // pred_region
        %s235 = ssub.s32 %s13, 2
        // Predicated region
        $region37: #{tpu_custom_call.1} parent=35 // pred_check
          %p236 = pneg %p84
        $region38: #{tpu_custom_call.1} parent=35 // pred_check_branch
          %238 = sbr.rel (%p236) target = $region40
        $region39: #{tpu_custom_call.1} parent=35 // pred_region
          %s239 = sand.u32 %s69, 1
          %s240 = scalar_lea.sflag [#allocation4], %s239
          %s241 = sand.u32 %s69, 1
          %s242 = smul.addr %s241, 64
          %s243 = scalar_lea.vmem [#allocation5], %s242
          %244 = dma.done %s240, 1024
        $region40: #{tpu_custom_call.1} parent=35 // pred_fallthru
          _
      $region36: #{tpu_custom_call.1} parent=5 // pred_fallthru
        _
    $region6: #{tpu_custom_call.1} parent=1 // loop_footer
      %s17 = sadd.s32 1, %s13
    $region7: #{tpu_custom_call.1} parent=1 // loop_footer_branch
      %12 = sbr.rel target = $region3
    $region8: #{tpu_custom_call.1} parent=1 // loop_exit
      _
    %245 = vsyncpa [#allocation3], 1
    %s246 = scalar_lea.sflag [#allocation3], 1
    %247 = vsyncpa %s246, 1
    %248 = vsyncpa [#allocation4], 1
    %s249 = scalar_lea.sflag [#allocation4], 1
    %250 = vsyncpa %s249, 1

</llo_original>
